<compile_context>
chip_gen: v6e
topology: v6e:2x2x1
jax: 0.10.0
libtpu: 0.0.40
codegen_flags: <defaults>
</compile_context>

<pallas_src>
import jax
import jax.numpy as jnp
from jax.experimental import pallas as pl
from jax.experimental.pallas import tpu as pltpu


def _discriminator_kernel(x_ref, mask_ref,
                          w1a_ref, w1b_ref, b1_ref,
                          w2_ref, b2_ref,
                          w3_ref, b3_ref,
                          o_ref):
    # Blocks are (1, L, TD); drop the unit batch dim.
    x = x_ref[0].astype(jnp.bfloat16)        # (L, TD)
    mk = mask_ref[0].astype(jnp.bfloat16)    # (L, TD)

    # Layer 1: Linear(2L -> L) on concat([x, mask]) along features:
    #   concat([x, mask]) @ W1.T  ==  W1[:, :L] @ x  +  W1[:, L:] @ mask
    z1 = (jnp.dot(w1a_ref[...], x, preferred_element_type=jnp.float32)
          + jnp.dot(w1b_ref[...], mk, preferred_element_type=jnp.float32)
          + b1_ref[...])                     # (L, TD) f32; bias bcast on lanes
    z1 = jnp.maximum(z1, 0.0)

    # Layer 2: Linear(L -> L) + ReLU
    z2 = jnp.dot(w2_ref[...], z1.astype(jnp.bfloat16),
                 preferred_element_type=jnp.float32) + b2_ref[...]
    z2 = jnp.maximum(z2, 0.0)

    # Layer 3: Linear(L -> L) + Sigmoid
    z3 = jnp.dot(w3_ref[...], z2.astype(jnp.bfloat16),
                 preferred_element_type=jnp.float32) + b3_ref[...]
    o_ref[0] = jax.nn.sigmoid(z3)


def discriminator_forward(x, m, params, key):
    """x, m: (batch, length, dim) float32 -> (batch, length, dim) float32."""
    B, L, D = x.shape
    w1a, w1b, b1, w2, b2, w3, b3 = params

    # Random mask, same semantics as:
    #   h = torch.rand_like(m); mask = m.clone(); mask[h > 0.3] = 0.5
    # Done in the wrapper (pltpu.prng_* does not lower on CPU/interpret);
    # XLA fuses the uniform draw + select into one pass over m.
    h = jax.random.uniform(key, m.shape, dtype=jnp.float32)
    mask = jnp.where(h > 0.3, jnp.float32(0.5), m)

    # bf16 MXU operands (weights are tiny and VMEM-resident; one-time cast).
    w1a_b = w1a.astype(jnp.bfloat16)
    w1b_b = w1b.astype(jnp.bfloat16)
    w2_b = w2.astype(jnp.bfloat16)
    w3_b = w3.astype(jnp.bfloat16)

    # dim-tile: full D unless D is a large multiple of 128 (keeps blocks legal
    # w.r.t. the (8, 128) rule and tiles exact -- no partial blocks).
    if D % 128 == 0 and D > 512:
        TD = 512 if D % 512 == 0 else (256 if D % 256 == 0 else 128)
    else:
        TD = D
    grid = (B, pl.cdiv(D, TD))

    # VMEM budget: x/mask/out double-buffered tiles + resident weights/biases.
    tile_bytes = L * TD * 4
    vmem_needed = 3 * 2 * tile_bytes + 4 * (L * L * 2) + 3 * (L * 128 * 4)
    vmem_limit = int(min(max(2 * vmem_needed, 4 << 20), 32 << 20))

    io_spec = pl.BlockSpec((1, L, TD), lambda b, d: (b, 0, d))
    w_spec = pl.BlockSpec((L, L), lambda b, d: (0, 0))
    bias_spec = pl.BlockSpec((L, 1), lambda b, d: (0, 0))

    return pl.pallas_call(
        _discriminator_kernel,
        out_shape=jax.ShapeDtypeStruct((B, L, D), jnp.float32),
        grid=grid,
        in_specs=[io_spec, io_spec,
                  w_spec, w_spec, bias_spec,
                  w_spec, bias_spec,
                  w_spec, bias_spec],
        out_specs=io_spec,
        compiler_params=pltpu.CompilerParams(
            dimension_semantics=("parallel", "parallel"),
            vmem_limit_bytes=vmem_limit),
    )(x, mask, w1a_b, w1b_b, b1, w2_b, b2, w3_b, b3)


def init_params(key, length):
    """nn.Linear-style init U(-1/sqrt(fan_in), +); PyTorch (out, in) layout."""
    L = length
    ks = jax.random.split(key, 6)

    def lin(kw, kb, fan_in, fan_out):
        bound = float(fan_in) ** -0.5
        w = jax.random.uniform(kw, (fan_out, fan_in), jnp.float32, -bound, bound)
        b = jax.random.uniform(kb, (fan_out, 1), jnp.float32, -bound, bound)
        return w, b

    w1, b1 = lin(ks[0], ks[1], 2 * L, L)
    w2, b2 = lin(ks[2], ks[3], L, L)
    w3, b3 = lin(ks[4], ks[5], L, L)
    # Split W1 into the x-half / mask-half (concat order: [x, mask]).
    w1a, w1b = w1[:, :L], w1[:, L:]
    return (w1a, w1b, b1, w2, b2, w3, b3)


def _reference_forward(x, m, params, key):
    """Pure-JAX reference mirroring the PyTorch module (f32 math)."""
    w1a, w1b, b1, w2, b2, w3, b3 = params
    h = jax.random.uniform(key, m.shape, dtype=jnp.float32)
    mask = jnp.where(h > 0.3, jnp.float32(0.5), m)
    xt = jnp.swapaxes(x, 1, 2)                      # (B, D, L)
    mt = jnp.swapaxes(mask, 1, 2)                   # (B, D, L)
    w1 = jnp.concatenate([w1a, w1b], axis=1)        # (L, 2L)
    cat = jnp.concatenate([xt, mt], axis=-1)        # (B, D, 2L)
    z1 = jax.nn.relu(cat @ w1.T + b1[:, 0])
    z2 = jax.nn.relu(z1 @ w2.T + b2[:, 0])
    z3 = jax.nn.sigmoid(z2 @ w3.T + b3[:, 0])
    return jnp.swapaxes(z3, 1, 2)                   # (B, L, D)


if __name__ == "__main__":
    key = jax.random.PRNGKey(0)
    k_x, k_m, k_p, k_h = jax.random.split(key, 4)

    batch, length, dim = 2, 32, 8                   # args.length = 32
    x = jax.random.normal(k_x, (batch, length, dim), jnp.float32)
    m = (jax.random.uniform(k_m, (batch, length, dim)) > 0.5).astype(jnp.float32)

    params = init_params(k_p, length)

    out = discriminator_forward(x, m, params, k_h)
    out = jax.block_until_ready(out)

    assert out.shape == (batch, length, dim)
    assert bool(jnp.all((out >= 0.0) & (out <= 1.0)))

    ref = _reference_forward(x, m, params, k_h)
    assert bool(jnp.allclose(out, ref, atol=5e-2)), \
        float(jnp.max(jnp.abs(out - ref)))

    print("KERNEL_OK")
</pallas_src>

<mosaic_0001>
module attributes {stable_mosaic.version = 11 : i64} {
  func.func @_discriminator_kernel(%arg0: i32, %arg1: i32, %arg2: memref<1x32x8xf32, #tpu.memory_space<vmem>>, %arg3: memref<1x32x8xf32, #tpu.memory_space<vmem>>, %arg4: memref<32x32xbf16, #tpu.memory_space<vmem>>, %arg5: memref<32x32xbf16, #tpu.memory_space<vmem>>, %arg6: memref<32x1xf32, #tpu.memory_space<vmem>>, %arg7: memref<32x32xbf16, #tpu.memory_space<vmem>>, %arg8: memref<32x1xf32, #tpu.memory_space<vmem>>, %arg9: memref<32x32xbf16, #tpu.memory_space<vmem>>, %arg10: memref<32x1xf32, #tpu.memory_space<vmem>>, %arg11: memref<1x32x8xf32, #tpu.memory_space<vmem>>) attributes {dimension_semantics = [#tpu.dimension_semantics<parallel>, #tpu.dimension_semantics<parallel>], iteration_bounds = array<i64: 2, 1>, scalar_prefetch = 0 : i64, scratch_operands = 0 : i64, tpu.core_type = #tpu.core_type<tc>, window_params = [{transform_indices = @transform_0, window_bounds = array<i64: 1, 32, 8>}, {transform_indices = @transform_1, window_bounds = array<i64: 1, 32, 8>}, {pipeline_mode = #tpu.pipeline_mode<synchronous>, transform_indices = @transform_2, window_bounds = array<i64: 32, 32>}, {pipeline_mode = #tpu.pipeline_mode<synchronous>, transform_indices = @transform_3, window_bounds = array<i64: 32, 32>}, {pipeline_mode = #tpu.pipeline_mode<synchronous>, transform_indices = @transform_4, window_bounds = array<i64: 32, 1>}, {pipeline_mode = #tpu.pipeline_mode<synchronous>, transform_indices = @transform_5, window_bounds = array<i64: 32, 32>}, {pipeline_mode = #tpu.pipeline_mode<synchronous>, transform_indices = @transform_6, window_bounds = array<i64: 32, 1>}, {pipeline_mode = #tpu.pipeline_mode<synchronous>, transform_indices = @transform_7, window_bounds = array<i64: 32, 32>}, {pipeline_mode = #tpu.pipeline_mode<synchronous>, transform_indices = @transform_8, window_bounds = array<i64: 32, 1>}, {transform_indices = @transform_9, window_bounds = array<i64: 1, 32, 8>}]} {
    %c0 = arith.constant 0 : index
    %c0_0 = arith.constant 0 : index
    %c0_1 = arith.constant 0 : index
    %0 = vector.load %arg2[%c0, %c0_0, %c0_1] : memref<1x32x8xf32, #tpu.memory_space<vmem>>, vector<1x32x8xf32>
    %1 = vector.shape_cast %0 : vector<1x32x8xf32> to vector<32x8xf32>
    %2 = arith.truncf %1 : vector<32x8xf32> to vector<32x8xbf16>
    %c0_2 = arith.constant 0 : index
    %c0_3 = arith.constant 0 : index
    %c0_4 = arith.constant 0 : index
    %3 = vector.load %arg3[%c0_2, %c0_3, %c0_4] : memref<1x32x8xf32, #tpu.memory_space<vmem>>, vector<1x32x8xf32>
    %4 = vector.shape_cast %3 : vector<1x32x8xf32> to vector<32x8xf32>
    %5 = arith.truncf %4 : vector<32x8xf32> to vector<32x8xbf16>
    %c0_5 = arith.constant 0 : index
    %c0_6 = arith.constant 0 : index
    %6 = vector.load %arg4[%c0_5, %c0_6] : memref<32x32xbf16, #tpu.memory_space<vmem>>, vector<32x32xbf16>
    %cst = arith.constant dense<0.000000e+00> : vector<32x8xf32>
    %7 = tpu.matmul %6, %2, %cst {dimension_numbers = #tpu.dot_dimension_numbers<[1], [0], [0], [1], [0, 0, 1, 1], [], []>} : vector<32x32xbf16>, vector<32x8xbf16>, vector<32x8xf32> -> vector<32x8xf32>
    %c0_7 = arith.constant 0 : index
    %c0_8 = arith.constant 0 : index
    %8 = vector.load %arg5[%c0_7, %c0_8] : memref<32x32xbf16, #tpu.memory_space<vmem>>, vector<32x32xbf16>
    %cst_9 = arith.constant dense<0.000000e+00> : vector<32x8xf32>
    %9 = tpu.matmul %8, %5, %cst_9 {dimension_numbers = #tpu.dot_dimension_numbers<[1], [0], [0], [1], [0, 0, 1, 1], [], []>} : vector<32x32xbf16>, vector<32x8xbf16>, vector<32x8xf32> -> vector<32x8xf32>
    %10 = arith.addf %7, %9 : vector<32x8xf32>
    %c0_10 = arith.constant 0 : index
    %c0_11 = arith.constant 0 : index
    %11 = vector.load %arg6[%c0_10, %c0_11] : memref<32x1xf32, #tpu.memory_space<vmem>>, vector<32x1xf32>
    %12 = vector.broadcast %11 : vector<32x1xf32> to vector<32x8xf32>
    %13 = arith.addf %10, %12 : vector<32x8xf32>
    %cst_12 = arith.constant 0.000000e+00 : f32
    %14 = vector.broadcast %cst_12 : f32 to vector<32x8xf32>
    %15 = arith.maximumf %13, %14 : vector<32x8xf32>
    %c0_13 = arith.constant 0 : index
    %c0_14 = arith.constant 0 : index
    %16 = vector.load %arg7[%c0_13, %c0_14] : memref<32x32xbf16, #tpu.memory_space<vmem>>, vector<32x32xbf16>
    %17 = arith.truncf %15 : vector<32x8xf32> to vector<32x8xbf16>
    %cst_15 = arith.constant dense<0.000000e+00> : vector<32x8xf32>
    %18 = tpu.matmul %16, %17, %cst_15 {dimension_numbers = #tpu.dot_dimension_numbers<[1], [0], [0], [1], [0, 0, 1, 1], [], []>} : vector<32x32xbf16>, vector<32x8xbf16>, vector<32x8xf32> -> vector<32x8xf32>
    %c0_16 = arith.constant 0 : index
    %c0_17 = arith.constant 0 : index
    %19 = vector.load %arg8[%c0_16, %c0_17] : memref<32x1xf32, #tpu.memory_space<vmem>>, vector<32x1xf32>
    %20 = vector.broadcast %19 : vector<32x1xf32> to vector<32x8xf32>
    %21 = arith.addf %18, %20 : vector<32x8xf32>
    %cst_18 = arith.constant 0.000000e+00 : f32
    %22 = vector.broadcast %cst_18 : f32 to vector<32x8xf32>
    %23 = arith.maximumf %21, %22 : vector<32x8xf32>
    %c0_19 = arith.constant 0 : index
    %c0_20 = arith.constant 0 : index
    %24 = vector.load %arg9[%c0_19, %c0_20] : memref<32x32xbf16, #tpu.memory_space<vmem>>, vector<32x32xbf16>
    %25 = arith.truncf %23 : vector<32x8xf32> to vector<32x8xbf16>
    %cst_21 = arith.constant dense<0.000000e+00> : vector<32x8xf32>
    %26 = tpu.matmul %24, %25, %cst_21 {dimension_numbers = #tpu.dot_dimension_numbers<[1], [0], [0], [1], [0, 0, 1, 1], [], []>} : vector<32x32xbf16>, vector<32x8xbf16>, vector<32x8xf32> -> vector<32x8xf32>
    %c0_22 = arith.constant 0 : index
    %c0_23 = arith.constant 0 : index
    %27 = vector.load %arg10[%c0_22, %c0_23] : memref<32x1xf32, #tpu.memory_space<vmem>>, vector<32x1xf32>
    %28 = vector.broadcast %27 : vector<32x1xf32> to vector<32x8xf32>
    %29 = arith.addf %26, %28 : vector<32x8xf32>
    %30 = arith.negf %29 : vector<32x8xf32>
    %31 = math.exp %30 : vector<32x8xf32>
    %cst_24 = arith.constant 1.000000e+00 : f32
    %32 = vector.broadcast %cst_24 : f32 to vector<32x8xf32>
    %33 = arith.addf %32, %31 : vector<32x8xf32>
    %34 = arith.divf %32, %33 : vector<32x8xf32>
    %c0_25 = arith.constant 0 : index
    %c0_26 = arith.constant 0 : index
    %c0_27 = arith.constant 0 : index
    %35 = vector.load %arg11[%c0_25, %c0_26, %c0_27] : memref<1x32x8xf32, #tpu.memory_space<vmem>>, vector<1x32x8xf32>
    %36 = vector.shape_cast %35 : vector<1x32x8xf32> to vector<32x8xf32>
    %37 = vector.shape_cast %34 : vector<32x8xf32> to vector<1x32x8xf32>
    tpu.vector_store %arg11[%c0_25, %c0_26, %c0_27], %37 {strides = array<i32>} : memref<1x32x8xf32, #tpu.memory_space<vmem>>, vector<1x32x8xf32>,
    return
  }
  func.func @transform_0(%arg0: i32, %arg1: i32) -> (i32, i32, i32) {
    %c0_i32 = arith.constant 0 : i32
    %c0_i32_0 = arith.constant 0 : i32
    return %arg0, %c0_i32, %arg1 : i32, i32, i32
  }
  func.func @transform_1(%arg0: i32, %arg1: i32) -> (i32, i32, i32) {
    %c0_i32 = arith.constant 0 : i32
    %c0_i32_0 = arith.constant 0 : i32
    return %arg0, %c0_i32, %arg1 : i32, i32, i32
  }
  func.func @transform_2(%arg0: i32, %arg1: i32) -> (i32, i32) {
    %c0_i32 = arith.constant 0 : i32
    %c0_i32_0 = arith.constant 0 : i32
    %c0_i32_1 = arith.constant 0 : i32
    return %c0_i32, %c0_i32_0 : i32, i32
  }
  func.func @transform_3(%arg0: i32, %arg1: i32) -> (i32, i32) {
    %c0_i32 = arith.constant 0 : i32
    %c0_i32_0 = arith.constant 0 : i32
    %c0_i32_1 = arith.constant 0 : i32
    return %c0_i32, %c0_i32_0 : i32, i32
  }
  func.func @transform_4(%arg0: i32, %arg1: i32) -> (i32, i32) {
    %c0_i32 = arith.constant 0 : i32
    %c0_i32_0 = arith.constant 0 : i32
    %c0_i32_1 = arith.constant 0 : i32
    return %c0_i32, %c0_i32_0 : i32, i32
  }
  func.func @transform_5(%arg0: i32, %arg1: i32) -> (i32, i32) {
    %c0_i32 = arith.constant 0 : i32
    %c0_i32_0 = arith.constant 0 : i32
    %c0_i32_1 = arith.constant 0 : i32
    return %c0_i32, %c0_i32_0 : i32, i32
  }
  func.func @transform_6(%arg0: i32, %arg1: i32) -> (i32, i32) {
    %c0_i32 = arith.constant 0 : i32
    %c0_i32_0 = arith.constant 0 : i32
    %c0_i32_1 = arith.constant 0 : i32
    return %c0_i32, %c0_i32_0 : i32, i32
  }
  func.func @transform_7(%arg0: i32, %arg1: i32) -> (i32, i32) {
    %c0_i32 = arith.constant 0 : i32
    %c0_i32_0 = arith.constant 0 : i32
    %c0_i32_1 = arith.constant 0 : i32
    return %c0_i32, %c0_i32_0 : i32, i32
  }
  func.func @transform_8(%arg0: i32, %arg1: i32) -> (i32, i32) {
    %c0_i32 = arith.constant 0 : i32
    %c0_i32_0 = arith.constant 0 : i32
    %c0_i32_1 = arith.constant 0 : i32
    return %c0_i32, %c0_i32_0 : i32, i32
  }
  func.func @transform_9(%arg0: i32, %arg1: i32) -> (i32, i32, i32) {
    %c0_i32 = arith.constant 0 : i32
    %c0_i32_0 = arith.constant 0 : i32
    return %arg0, %c0_i32, %arg1 : i32, i32, i32
  }
}

</mosaic_0001>

<llo_original>
// kernel: tpu_custom_call.1
$region0: #{tpu_custom_call.1}
  #allocation0 [shape = 'u32[]', space=smem, size = 0x4, offset = 0x4, fixed_abs, tag = 'smem constant byte address 0x4 - core index']
  #allocation1 [shape = 'u32[144,128]{1,0:T(1,128)}', space=vmem, size = 0x12000, scoped, tag = 'internal scratch']
  %s0 = inlined_call_operand.vmem [shape: f32[2,32,8], index: 0, kind: input, shape index: {}]
  %s1 = inlined_call_operand.vmem [shape: f32[2,32,8], index: 1, kind: input, shape index: {}]
  %s2 = inlined_call_operand.vmem [shape: bf16[32,32], index: 2, kind: input, shape index: {}]
  %s3 = inlined_call_operand.vmem [shape: bf16[32,32], index: 3, kind: input, shape index: {}]
  %s4 = inlined_call_operand.vmem [shape: f32[32,1], index: 4, kind: input, shape index: {}]
  %s5 = inlined_call_operand.vmem [shape: bf16[32,32], index: 5, kind: input, shape index: {}]
  %s6 = inlined_call_operand.vmem [shape: f32[32,1], index: 6, kind: input, shape index: {}]
  %s7 = inlined_call_operand.vmem [shape: bf16[32,32], index: 7, kind: input, shape index: {}]
  %s8 = inlined_call_operand.vmem [shape: f32[32,1], index: 8, kind: input, shape index: {}]
  %s9 = inlined_call_operand.vmem [shape: f32[2,32,8], index: 9, kind: output, shape index: {}]
  %s10 = sld [smem:[#allocation0]]
  $region69: #{tpu_custom_call.1} parent=0
    _
  %s12 = ssub.s32 1, %s10
  %s13 = scalar_select 0, %s12, %s10
  loop: start=0, step=1, limit=4
  $region2: #{tpu_custom_call.1} parent=0 // loop_pre_header
    _
  $region3: #{tpu_custom_call.1} parent=0 // loop_header
    %s15 = sphi 0, %s19
    %p16 = scmp.ge.s32.totalorder %s15, 4
    %s22 = sphi 0, %s34
    %s23 = sphi 0, %s30
    %s24 = sphi 0, %s22
    %s25 = sphi 0, %s23
    %s26 = sphi 0, %s24
    %s27 = sphi 0, %s25
    %s39 = sphi 0, %s41
    %s42 = sphi 0, %s39
    %s43 = sphi 0, %s42
    %s59 = sphi 0, %s43
    %s67 = sphi 0, %s69
    %s70 = sphi 0, %s67
    %s71 = sphi 0, %s70
    %s87 = sphi 0, %s71
    %s91 = sphi 0, %s91
    %s93 = sphi 0, %s91
    %s94 = sphi 0, %s93
    %s108 = sphi 0, %s94
    %s112 = sphi 0, %s112
    %s114 = sphi 0, %s112
    %s115 = sphi 0, %s114
    %s129 = sphi 0, %s115
    %s133 = sphi 0, %s133
    %s135 = sphi 0, %s133
    %s136 = sphi 0, %s135
    %s150 = sphi 0, %s136
    %s154 = sphi 0, %s154
    %s156 = sphi 0, %s154
    %s157 = sphi 0, %s156
    %s171 = sphi 0, %s157
    %s175 = sphi 0, %s175
    %s177 = sphi 0, %s175
    %s178 = sphi 0, %s177
    %s192 = sphi 0, %s178
    %s196 = sphi 0, %s196
    %s198 = sphi 0, %s196
    %s199 = sphi 0, %s198
    %s213 = sphi 0, %s199
    %s217 = sphi 0, %s217
    %s219 = sphi 0, %s217
    %s220 = sphi 0, %s219
    %s234 = sphi 0, %s220
    %s242 = sphi 0, %s244
    %s245 = sphi 0, %s242
    %s246 = sphi 0, %s245
    %s262 = sphi 0, %s246
  $region4: #{tpu_custom_call.1} parent=0 // loop_header_branch
    %18 = sbr.rel (%p16) target = $region8
  $region5: #{tpu_custom_call.1} parent=0 // loop_body
    %s20 = ssub.s32 %s15, 1
    %s21 = ssub.s32 %s15, 2
    %s28 = sadd.s32 1, %s23
    %p29 = scmp.ge.s32.totalorder %s28, 1
    %s30 = scalar_select %p29, 0, %s28
    %s31 = sadd.s32 1, %s22
    %s32 = scalar_select %p29, %s31, %s22
    %p33 = scmp.ge.s32.totalorder %s32, 2
    %s34 = scalar_select %p33, 0, %s32
    %s35 = ssub.s32 %s22, %s34
    %s36 = ssub.s32 %s23, %s30
    %s37 = sor.u32 %s35, %s36
    %p38 = scmp.eq.s32.totalorder %s37, 0
    %s40 = sadd.s32 %s39, 1
    %s41 = scalar_select %p38, %s39, %s40
    %p44 = pneg %p38
    %p45 = scmp.eq.s32.totalorder %s15, 1
    %p46 = por %p44, %p45
    %p47 = scmp.ne.s32.totalorder %s39, %s42
    %p48 = scmp.eq.s32.totalorder %s15, 0
    %p49 = por %p47, %p48
    %p50 = scmp.ne.s32.totalorder %s39, %s42
    %p51 = scmp.eq.s32.totalorder %s20, 1
    %p52 = por %p50, %p51
    %p53 = scmp.ne.s32.totalorder %s42, %s43
    %p54 = scmp.eq.s32.totalorder %s20, 0
    %p55 = por %p53, %p54
    %p56 = scmp.ne.s32.totalorder %s42, %s43
    %p57 = scmp.eq.s32.totalorder %s21, 1
    %p58 = por %p56, %p57
    %p60 = scmp.ne.s32.totalorder %s43, %s59
    %p61 = scmp.eq.s32.totalorder %s21, 0
    %p62 = por %p60, %p61
    %s63 = ssub.s32 %s22, %s34
    %s64 = ssub.s32 %s23, %s30
    %s65 = sor.u32 %s63, %s64
    %p66 = scmp.eq.s32.totalorder %s65, 0
    %s68 = sadd.s32 %s67, 1
    %s69 = scalar_select %p66, %s67, %s68
    %p72 = pneg %p66
    %p73 = scmp.eq.s32.totalorder %s15, 1
    %p74 = por %p72, %p73
    %p75 = scmp.ne.s32.totalorder %s67, %s70
    %p76 = scmp.eq.s32.totalorder %s15, 0
    %p77 = por %p75, %p76
    %p78 = scmp.ne.s32.totalorder %s67, %s70
    %p79 = scmp.eq.s32.totalorder %s20, 1
    %p80 = por %p78, %p79
    %p81 = scmp.ne.s32.totalorder %s70, %s71
    %p82 = scmp.eq.s32.totalorder %s20, 0
    %p83 = por %p81, %p82
    %p84 = scmp.ne.s32.totalorder %s70, %s71
    %p85 = scmp.eq.s32.totalorder %s21, 1
    %p86 = por %p84, %p85
    %p88 = scmp.ne.s32.totalorder %s71, %s87
    %p89 = scmp.eq.s32.totalorder %s21, 0
    %p90 = por %p88, %p89
    %s92 = sadd.s32 %s91, 1
    %p95 = scmp.eq.s32.totalorder %s15, 1
    %p96 = scmp.ne.s32.totalorder %s91, %s93
    %p97 = scmp.eq.s32.totalorder %s15, 0
    %p98 = por %p96, %p97
    %p99 = scmp.ne.s32.totalorder %s91, %s93
    %p100 = scmp.eq.s32.totalorder %s20, 1
    %p101 = por %p99, %p100
    %p102 = scmp.ne.s32.totalorder %s93, %s94
    %p103 = scmp.eq.s32.totalorder %s20, 0
    %p104 = por %p102, %p103
    %p105 = scmp.ne.s32.totalorder %s93, %s94
    %p106 = scmp.eq.s32.totalorder %s21, 1
    %p107 = por %p105, %p106
    %p109 = scmp.ne.s32.totalorder %s94, %s108
    %p110 = scmp.eq.s32.totalorder %s21, 0
    %p111 = por %p109, %p110
    %s113 = sadd.s32 %s112, 1
    %p116 = scmp.eq.s32.totalorder %s15, 1
    %p117 = scmp.ne.s32.totalorder %s112, %s114
    %p118 = scmp.eq.s32.totalorder %s15, 0
    %p119 = por %p117, %p118
    %p120 = scmp.ne.s32.totalorder %s112, %s114
    %p121 = scmp.eq.s32.totalorder %s20, 1
    %p122 = por %p120, %p121
    %p123 = scmp.ne.s32.totalorder %s114, %s115
    %p124 = scmp.eq.s32.totalorder %s20, 0
    %p125 = por %p123, %p124
    %p126 = scmp.ne.s32.totalorder %s114, %s115
    %p127 = scmp.eq.s32.totalorder %s21, 1
    %p128 = por %p126, %p127
    %p130 = scmp.ne.s32.totalorder %s115, %s129
    %p131 = scmp.eq.s32.totalorder %s21, 0
    %p132 = por %p130, %p131
    %s134 = sadd.s32 %s133, 1
    %p137 = scmp.eq.s32.totalorder %s15, 1
    %p138 = scmp.ne.s32.totalorder %s133, %s135
    %p139 = scmp.eq.s32.totalorder %s15, 0
    %p140 = por %p138, %p139
    %p141 = scmp.ne.s32.totalorder %s133, %s135
    %p142 = scmp.eq.s32.totalorder %s20, 1
    %p143 = por %p141, %p142
    %p144 = scmp.ne.s32.totalorder %s135, %s136
    %p145 = scmp.eq.s32.totalorder %s20, 0
    %p146 = por %p144, %p145
    %p147 = scmp.ne.s32.totalorder %s135, %s136
    %p148 = scmp.eq.s32.totalorder %s21, 1
    %p149 = por %p147, %p148
    %p151 = scmp.ne.s32.totalorder %s136, %s150
    %p152 = scmp.eq.s32.totalorder %s21, 0
    %p153 = por %p151, %p152
    %s155 = sadd.s32 %s154, 1
    %p158 = scmp.eq.s32.totalorder %s15, 1
    %p159 = scmp.ne.s32.totalorder %s154, %s156
    %p160 = scmp.eq.s32.totalorder %s15, 0
    %p161 = por %p159, %p160
    %p162 = scmp.ne.s32.totalorder %s154, %s156
    %p163 = scmp.eq.s32.totalorder %s20, 1
    %p164 = por %p162, %p163
    %p165 = scmp.ne.s32.totalorder %s156, %s157
    %p166 = scmp.eq.s32.totalorder %s20, 0
    %p167 = por %p165, %p166
    %p168 = scmp.ne.s32.totalorder %s156, %s157
    %p169 = scmp.eq.s32.totalorder %s21, 1
    %p170 = por %p168, %p169
    %p172 = scmp.ne.s32.totalorder %s157, %s171
    %p173 = scmp.eq.s32.totalorder %s21, 0
    %p174 = por %p172, %p173
    %s176 = sadd.s32 %s175, 1
    %p179 = scmp.eq.s32.totalorder %s15, 1
    %p180 = scmp.ne.s32.totalorder %s175, %s177
    %p181 = scmp.eq.s32.totalorder %s15, 0
    %p182 = por %p180, %p181
    %p183 = scmp.ne.s32.totalorder %s175, %s177
    %p184 = scmp.eq.s32.totalorder %s20, 1
    %p185 = por %p183, %p184
    %p186 = scmp.ne.s32.totalorder %s177, %s178
    %p187 = scmp.eq.s32.totalorder %s20, 0
    %p188 = por %p186, %p187
    %p189 = scmp.ne.s32.totalorder %s177, %s178
    %p190 = scmp.eq.s32.totalorder %s21, 1
    %p191 = por %p189, %p190
    %p193 = scmp.ne.s32.totalorder %s178, %s192
    %p194 = scmp.eq.s32.totalorder %s21, 0
    %p195 = por %p193, %p194
    %s197 = sadd.s32 %s196, 1
    %p200 = scmp.eq.s32.totalorder %s15, 1
    %p201 = scmp.ne.s32.totalorder %s196, %s198
    %p202 = scmp.eq.s32.totalorder %s15, 0
    %p203 = por %p201, %p202
    %p204 = scmp.ne.s32.totalorder %s196, %s198
    %p205 = scmp.eq.s32.totalorder %s20, 1
    %p206 = por %p204, %p205
    %p207 = scmp.ne.s32.totalorder %s198, %s199
    %p208 = scmp.eq.s32.totalorder %s20, 0
    %p209 = por %p207, %p208
    %p210 = scmp.ne.s32.totalorder %s198, %s199
    %p211 = scmp.eq.s32.totalorder %s21, 1
    %p212 = por %p210, %p211
    %p214 = scmp.ne.s32.totalorder %s199, %s213
    %p215 = scmp.eq.s32.totalorder %s21, 0
    %p216 = por %p214, %p215
    %s218 = sadd.s32 %s217, 1
    %p221 = scmp.eq.s32.totalorder %s15, 1
    %p222 = scmp.ne.s32.totalorder %s217, %s219
    %p223 = scmp.eq.s32.totalorder %s15, 0
    %p224 = por %p222, %p223
    %p225 = scmp.ne.s32.totalorder %s217, %s219
    %p226 = scmp.eq.s32.totalorder %s20, 1
    %p227 = por %p225, %p226
    %p228 = scmp.ne.s32.totalorder %s219, %s220
    %p229 = scmp.eq.s32.totalorder %s20, 0
    %p230 = por %p228, %p229
    %p231 = scmp.ne.s32.totalorder %s219, %s220
    %p232 = scmp.eq.s32.totalorder %s21, 1
    %p233 = por %p231, %p232
    %p235 = scmp.ne.s32.totalorder %s220, %s234
    %p236 = scmp.eq.s32.totalorder %s21, 0
    %p237 = por %p235, %p236
    %s238 = ssub.s32 %s22, %s34
    %s239 = ssub.s32 %s23, %s30
    %s240 = sor.u32 %s238, %s239
    %p241 = scmp.eq.s32.totalorder %s240, 0
    %s243 = sadd.s32 %s242, 1
    %s244 = scalar_select %p241, %s242, %s243
    %p247 = pneg %p241
    %p248 = scmp.eq.s32.totalorder %s15, 1
    %p249 = por %p247, %p248
    %p250 = scmp.ne.s32.totalorder %s242, %s245
    %p251 = scmp.eq.s32.totalorder %s15, 0
    %p252 = por %p250, %p251
    %p253 = scmp.ne.s32.totalorder %s242, %s245
    %p254 = scmp.eq.s32.totalorder %s20, 1
    %p255 = por %p253, %p254
    %p256 = scmp.ne.s32.totalorder %s245, %s246
    %p257 = scmp.eq.s32.totalorder %s20, 0
    %p258 = por %p256, %p257
    %p259 = scmp.ne.s32.totalorder %s245, %s246
    %p260 = scmp.eq.s32.totalorder %s21, 1
    %p261 = por %p259, %p260
    %p263 = scmp.ne.s32.totalorder %s246, %s262
    %p264 = scmp.eq.s32.totalorder %s21, 0
    %p265 = por %p263, %p264
    %p266 = scmp.le.s32.totalorder 1, %s15
    %p267 = scmp.lt.s32.totalorder %s15, 3
    %p268 = pnand %p266, %p267
    %p269 = pneg %p268
    // Predicated region
    $region9: #{tpu_custom_call.1} parent=5 // pred_check
      _
    $region10: #{tpu_custom_call.1} parent=5 // pred_check_branch
      %271 = sbr.rel (%p268) target = $region12
    $region11: #{tpu_custom_call.1} parent=5 // pred_region
      %s272 = ssub.s32 %s15, 1
      // Predicated region
      $region13: #{tpu_custom_call.1} parent=11 // pred_check
        %p273 = pneg %p104
      $region14: #{tpu_custom_call.1} parent=11 // pred_check_branch
        %275 = sbr.rel (%p273) target = $region16
      $region15: #{tpu_custom_call.1} parent=11 // pred_region
        _
      $region16: #{tpu_custom_call.1} parent=11 // pred_fallthru
        _
      // Predicated region
      $region17: #{tpu_custom_call.1} parent=11 // pred_check
        %p276 = pneg %p125
      $region18: #{tpu_custom_call.1} parent=11 // pred_check_branch
        %278 = sbr.rel (%p276) target = $region20
      $region19: #{tpu_custom_call.1} parent=11 // pred_region
        _
      $region20: #{tpu_custom_call.1} parent=11 // pred_fallthru
        _
      // Predicated region
      $region21: #{tpu_custom_call.1} parent=11 // pred_check
        %p279 = pneg %p146
      $region22: #{tpu_custom_call.1} parent=11 // pred_check_branch
        %281 = sbr.rel (%p279) target = $region24
      $region23: #{tpu_custom_call.1} parent=11 // pred_region
        _
      $region24: #{tpu_custom_call.1} parent=11 // pred_fallthru
        _
      // Predicated region
      $region25: #{tpu_custom_call.1} parent=11 // pred_check
        %p282 = pneg %p167
      $region26: #{tpu_custom_call.1} parent=11 // pred_check_branch
        %284 = sbr.rel (%p282) target = $region28
      $region27: #{tpu_custom_call.1} parent=11 // pred_region
        _
      $region28: #{tpu_custom_call.1} parent=11 // pred_fallthru
        _
      // Predicated region
      $region29: #{tpu_custom_call.1} parent=11 // pred_check
        %p285 = pneg %p188
      $region30: #{tpu_custom_call.1} parent=11 // pred_check_branch
        %287 = sbr.rel (%p285) target = $region32
      $region31: #{tpu_custom_call.1} parent=11 // pred_region
        _
      $region32: #{tpu_custom_call.1} parent=11 // pred_fallthru
        _
      // Predicated region
      $region33: #{tpu_custom_call.1} parent=11 // pred_check
        %p288 = pneg %p209
      $region34: #{tpu_custom_call.1} parent=11 // pred_check_branch
        %290 = sbr.rel (%p288) target = $region36
      $region35: #{tpu_custom_call.1} parent=11 // pred_region
        _
      $region36: #{tpu_custom_call.1} parent=11 // pred_fallthru
        _
      // Predicated region
      $region37: #{tpu_custom_call.1} parent=11 // pred_check
        %p291 = pneg %p230
      $region38: #{tpu_custom_call.1} parent=11 // pred_check_branch
        %293 = sbr.rel (%p291) target = $region40
      $region39: #{tpu_custom_call.1} parent=11 // pred_region
        _
      $region40: #{tpu_custom_call.1} parent=11 // pred_fallthru
        _
    $region12: #{tpu_custom_call.1} parent=5 // pred_fallthru
      _
    %p294 = scmp.lt.s32.totalorder %s15, 2
    // Predicated region
    $region41: #{tpu_custom_call.1} parent=5 // pred_check
      %p295 = pneg %p294
    $region42: #{tpu_custom_call.1} parent=5 // pred_check_branch
      %297 = sbr.rel (%p295) target = $region44
    $region43: #{tpu_custom_call.1} parent=5 // pred_region
      // Predicated region
      $region45: #{tpu_custom_call.1} parent=43 // pred_check
        %p298 = pneg %p49
      $region46: #{tpu_custom_call.1} parent=43 // pred_check_branch
        %300 = sbr.rel (%p298) target = $region48
      $region47: #{tpu_custom_call.1} parent=43 // pred_region
        %p301 = scmp.lt.s32.totalorder %s22, 1
        %s302 = scalar_select %p301, %s22, 1
        %p303 = scmp.lt.s32.totalorder %s23, 0
        %s304 = scalar_select %p303, %s23, 0
        %s305 = smul.addr %s302, 4
        %s306 = sadd.s32 %s304, %s305
        %s307 = smul.addr %s306, 8
        %s308 = scalar_lea.vmem %s0, %s307
      $region48: #{tpu_custom_call.1} parent=43 // pred_fallthru
        _
      // Predicated region
      $region49: #{tpu_custom_call.1} parent=43 // pred_check
        %p309 = pneg %p77
      $region50: #{tpu_custom_call.1} parent=43 // pred_check_branch
        %311 = sbr.rel (%p309) target = $region52
      $region51: #{tpu_custom_call.1} parent=43 // pred_region
        %p312 = scmp.lt.s32.totalorder %s22, 1
        %s313 = scalar_select %p312, %s22, 1
        %p314 = scmp.lt.s32.totalorder %s23, 0
        %s315 = scalar_select %p314, %s23, 0
        %s316 = smul.addr %s313, 4
        %s317 = sadd.s32 %s315, %s316
        %s318 = smul.addr %s317, 8
        %s319 = scalar_lea.vmem %s1, %s318
      $region52: #{tpu_custom_call.1} parent=43 // pred_fallthru
        _
    $region44: #{tpu_custom_call.1} parent=5 // pred_fallthru
      _
    %p320 = scmp.le.s32.totalorder 1, %s15
    %p321 = scmp.lt.s32.totalorder %s15, 3
    %p322 = pnand %p320, %p321
    %p323 = pneg %p322
    // Predicated region
    $region53: #{tpu_custom_call.1} parent=5 // pred_check
      _
    $region54: #{tpu_custom_call.1} parent=5 // pred_check_branch
      %325 = sbr.rel (%p322) target = $region56
    $region55: #{tpu_custom_call.1} parent=5 // pred_region
      %s326 = ssub.s32 %s15, 1
      %p327 = scmp.lt.s32.totalorder %s24, 1
      %s328 = scalar_select %p327, %s24, 1
      %p329 = scmp.lt.s32.totalorder %s25, 0
      %s330 = scalar_select %p329, %s25, 0
      %s331 = smul.addr %s328, 4
      %s332 = sadd.s32 %s330, %s331
      %s333 = smul.addr %s332, 8
      %s334 = scalar_lea.vmem %s0, %s333
      %p335 = pneg %p55
      %p336 = pneg %p52
      %p337 = scmp.lt.s32.totalorder %s24, 1
      %s338 = scalar_select %p337, %s24, 1
      %p339 = scmp.lt.s32.totalorder %s25, 0
      %s340 = scalar_select %p339, %s25, 0
      %s341 = smul.addr %s338, 4
      %s342 = sadd.s32 %s340, %s341
      %s343 = smul.addr %s342, 8
      %s344 = scalar_lea.vmem %s1, %s343
      %p345 = pneg %p83
      %p346 = pneg %p80
      %p347 = pneg %p104
      %p348 = pneg %p101
      %p349 = pneg %p125
      %p350 = pneg %p122
      %p351 = pneg %p146
      %p352 = pneg %p143
      %p353 = pneg %p167
      %p354 = pneg %p164
      %p355 = pneg %p188
      %p356 = pneg %p185
      %p357 = pneg %p209
      %p358 = pneg %p206
      %p359 = pneg %p230
      %p360 = pneg %p227
      %p361 = pneg %p258
      %p362 = pneg %p255
      %p363 = scmp.lt.s32.totalorder %s24, 1
      %s364 = scalar_select %p363, %s24, 1
      %p365 = scmp.lt.s32.totalorder %s25, 0
      %s366 = scalar_select %p365, %s25, 0
      %s367 = smul.addr %s364, 4
      %s368 = sadd.s32 %s366, %s367
      %s369 = smul.addr %s368, 8
      %s370 = scalar_lea.vmem %s9, %s369
      %p371 = scmp.lt.s32.totalorder %s24, 1
      %s372 = scalar_select %p371, %s24, 1
      %p373 = scmp.lt.s32.totalorder %s25, 0
      %s374 = scalar_select %p373, %s25, 0
      %s375 = smul.addr %s372, 4
      %s376 = sadd.s32 %s374, %s375
      %s377 = smul.addr %s376, 8
      %s378 = scalar_lea.vmem %s0, %s377
      %p379 = scmp.lt.s32.totalorder %s24, 1
      %s380 = scalar_select %p379, %s24, 1
      %p381 = scmp.lt.s32.totalorder %s25, 0
      %s382 = scalar_select %p381, %s25, 0
      %s383 = smul.addr %s380, 4
      %s384 = sadd.s32 %s382, %s383
      %s385 = smul.addr %s384, 8
      %s386 = scalar_lea.vmem %s1, %s385
      %p387 = scmp.lt.s32.totalorder %s24, 1
      %s388 = scalar_select %p387, %s24, 1
      %p389 = scmp.lt.s32.totalorder %s25, 0
      %s390 = scalar_select %p389, %s25, 0
      %s391 = smul.addr %s388, 4
      %s392 = sadd.s32 %s390, %s391
      %s393 = smul.addr %s392, 8
      %s394 = scalar_lea.vmem %s9, %s393
      %v396 = vld [vmem:[%s378] sm:$0xff]
      %v397 = vld [vmem:[%s378 + $0x8] sm:$0xff]
      %v398 = vld [vmem:[%s378 + $0x10] sm:$0xff]
      %v399 = vld [vmem:[%s378 + $0x18] sm:$0xff]
      %v400 = vpack.c.bf16 %v397, %v396
      %v401 = vpack.c.bf16 %v399, %v398
      %v402 = vld [vmem:[%s386] sm:$0xff]
      %v403 = vld [vmem:[%s386 + $0x8] sm:$0xff]
      %v404 = vld [vmem:[%s386 + $0x10] sm:$0xff]
      %v405 = vld [vmem:[%s386 + $0x18] sm:$0xff]
      %v406 = vpack.c.bf16 %v403, %v402
      %v407 = vpack.c.bf16 %v405, %v404
      %v408 = vld [vmem:[%s2] sm:$0xf]
      %v409 = vld [vmem:[%s2 + $0x4] sm:$0xf]
      %v410 = vld [vmem:[%s2 + $0x8] sm:$0xf]
      %v411 = vld [vmem:[%s2 + $0xc] sm:$0xf]
      %v412 = vld [vmem:[%s3] sm:$0xf]
      %v413 = vld [vmem:[%s3 + $0x4] sm:$0xf]
      %v414 = vld [vmem:[%s3 + $0x8] sm:$0xf]
      %v415 = vld [vmem:[%s3 + $0xc] sm:$0xf]
      %v420 = vunpack.c.l.b16 %v412
      %v421 = vunpack.c.l.b16 %v413
      %v422 = vunpack.c.l.b16 %v414
      %v423 = vunpack.c.l.b16 %v415
      %v424 = vpack.c.b16 %v421, %v420
      %v425 = vpack.c.b16 %v423, %v422
      %vm426 = vcmask 261120
      %v428 = vsel %vm426, %v424, 0
      %v431 = vsel %vm426, %v425, 0
      %433 = vmatprep.subr.bf16.mxu0 0
      %434 = vmatpush1.bf16.msra.mxu0 0
      %435 = vmatprep.subr.bf16.mxu0 0
      %436 = vmatpush1.bf16.msra.mxu0 0
      %437 = vmatprep.subr.bf16.mxu0 0
      %438 = vmatpush1.bf16.msra.mxu0 0
      %439 = vmatprep.subr.bf16.mxu0 0
      %440 = vmatpush1.bf16.msra.mxu0 0
      %441 = vmatprep.subr.bf16.mxu0 0
      %442 = vmatpush1.bf16.msra.mxu0 0
      %443 = vmatprep.subr.bf16.mxu0 0
      %444 = vmatpush1.bf16.msra.mxu0 0
      %445 = vmatprep.subr.bf16.mxu0 0
      %446 = vmatpush1.bf16.msra.mxu0 %v407
      %447 = vmatprep.subr.bf16.mxu0 0
      %448 = vmatpush1.bf16.msra.mxu0 %v406
      %449 = vmatprep.subr.bf16.mxu0 0
      %450 = vmatpush2.bf16.msra.mxu0 0
      %451 = vmatprep.subr.bf16.mxu0 0
      %452 = vmatpush2.bf16.msra.mxu0 0
      %453 = vmatprep.subr.bf16.mxu0 0
      %454 = vmatpush2.bf16.msra.mxu0 0
      %455 = vmatprep.subr.bf16.mxu0 0
      %456 = vmatpush2.bf16.msra.mxu0 0
      %457 = vmatprep.subr.bf16.mxu0 0
      %458 = vmatpush2.bf16.msra.mxu0 0
      %459 = vmatprep.subr.bf16.mxu0 0
      %460 = vmatpush2.bf16.msra.mxu0 0
      %461 = vmatprep.subr.bf16.mxu0 0
      %462 = vmatpush2.bf16.msra.mxu0 0
      %463 = vmatprep.subr.bf16.mxu0 0
      %464 = vmatpush2.bf16.msra.mxu0 0
      %465 = vmatprep.mubr.bf16.mxu0 0
      %466 = vmatmul.mubr.bf16.gmra.mxu0 %v428
      %v467 = vpop.f32.mrf.mxu0
      %v468 = vadd.f32 0.0, %v467
      %v469 = vpop.f32.mrf.mxu0
      %v470 = vpop.f32.mrf.mxu0
      %v471 = vadd.f32 0.0, %v470
      %v472 = vpop.f32.mrf.mxu0
      %473 = vmatprep.mubr.bf16.mxu0 0
      %474 = vmatmul.mubr.bf16.gmra.mxu0 %v431
      %v475 = vpop.f32.mrf.mxu0
      %v476 = vadd.f32 0.0, %v475
      %v477 = vpop.f32.mrf.mxu0
      %v478 = vpop.f32.mrf.mxu0
      %v479 = vadd.f32 0.0, %v478
      %v480 = vpop.f32.mrf.mxu0
      %481 = vdwg.mxu0
      %v486 = vunpack.c.l.b16 %v408
      %v487 = vunpack.c.l.b16 %v409
      %v488 = vunpack.c.l.b16 %v410
      %v489 = vunpack.c.l.b16 %v411
      %v490 = vpack.c.b16 %v487, %v486
      %v491 = vpack.c.b16 %v489, %v488
      %v493 = vsel %vm426, %v490, 0
      %v496 = vsel %vm426, %v491, 0
      %498 = vmatprep.subr.bf16.mxu0 0
      %499 = vmatpush1.bf16.msra.mxu0 0
      %500 = vmatprep.subr.bf16.mxu0 0
      %501 = vmatpush1.bf16.msra.mxu0 0
      %502 = vmatprep.subr.bf16.mxu0 0
      %503 = vmatpush1.bf16.msra.mxu0 0
      %504 = vmatprep.subr.bf16.mxu0 0
      %505 = vmatpush1.bf16.msra.mxu0 0
      %506 = vmatprep.subr.bf16.mxu0 0
      %507 = vmatpush1.bf16.msra.mxu0 0
      %508 = vmatprep.subr.bf16.mxu0 0
      %509 = vmatpush1.bf16.msra.mxu0 0
      %510 = vmatprep.subr.bf16.mxu0 0
      %511 = vmatpush1.bf16.msra.mxu0 %v401
      %512 = vmatprep.subr.bf16.mxu0 0
      %513 = vmatpush1.bf16.msra.mxu0 %v400
      %514 = vmatprep.subr.bf16.mxu0 0
      %515 = vmatpush2.bf16.msra.mxu0 0
      %516 = vmatprep.subr.bf16.mxu0 0
      %517 = vmatpush2.bf16.msra.mxu0 0
      %518 = vmatprep.subr.bf16.mxu0 0
      %519 = vmatpush2.bf16.msra.mxu0 0
      %520 = vmatprep.subr.bf16.mxu0 0
      %521 = vmatpush2.bf16.msra.mxu0 0
      %522 = vmatprep.subr.bf16.mxu0 0
      %523 = vmatpush2.bf16.msra.mxu0 0
      %524 = vmatprep.subr.bf16.mxu0 0
      %525 = vmatpush2.bf16.msra.mxu0 0
      %526 = vmatprep.subr.bf16.mxu0 0
      %527 = vmatpush2.bf16.msra.mxu0 0
      %528 = vmatprep.subr.bf16.mxu0 0
      %529 = vmatpush2.bf16.msra.mxu0 0
      %530 = vmatprep.mubr.bf16.mxu0 0
      %531 = vmatmul.mubr.bf16.gmra.mxu0 %v493
      %v532 = vpop.f32.mrf.mxu0
      %v533 = vadd.f32 %v468, %v532
      %v534 = vpop.f32.mrf.mxu0
      %v535 = vpop.f32.mrf.mxu0
      %v536 = vadd.f32 %v471, %v535
      %v537 = vpop.f32.mrf.mxu0
      %538 = vmatprep.mubr.bf16.mxu0 0
      %539 = vmatmul.mubr.bf16.gmra.mxu0 %v496
      %v540 = vpop.f32.mrf.mxu0
      %v541 = vadd.f32 %v476, %v540
      %v542 = vpop.f32.mrf.mxu0
      %v543 = vpop.f32.mrf.mxu0
      %v544 = vadd.f32 %v479, %v543
      %v545 = vpop.f32.mrf.mxu0
      %546 = vdwg.mxu0
      %v547 = vld [vmem:[%s4] sm:$0xff]
      %v548 = vld [vmem:[%s4 + $0x8] sm:$0xff]
      %v549 = vld [vmem:[%s4 + $0x10] sm:$0xff]
      %v550 = vld [vmem:[%s4 + $0x18] sm:$0xff]
      %552 = vset.pattern.permute.xlu0 0
      %553 = vperm.xlu0 %552, %v547
      %v554 = vpop.permute.xlu0 %553
      %557 = vset.pattern.permute.xlu0 0
      %558 = vperm.xlu0 %557, %v548
      %v559 = vpop.permute.xlu0 %558
      %562 = vset.pattern.permute.xlu0 0
      %563 = vperm.xlu0 %562, %v549
      %v564 = vpop.permute.xlu0 %563
      %567 = vset.pattern.permute.xlu0 0
      %568 = vperm.xlu0 %567, %v550
      %v569 = vpop.permute.xlu0 %568
      %v571 = vadd.f32 %v533, %v554
      %v572 = vadd.f32 %v536, %v559
      %v573 = vadd.f32 %v541, %v564
      %v574 = vadd.f32 %v544, %v569
      %v575 = vmax.f32 %v571, 0.0
      %v576 = vmax.f32 %v572, 0.0
      %v577 = vmax.f32 %v573, 0.0
      %v578 = vmax.f32 %v574, 0.0
      %v579 = vld [vmem:[%s5] sm:$0xf]
      %v580 = vld [vmem:[%s5 + $0x4] sm:$0xf]
      %v581 = vld [vmem:[%s5 + $0x8] sm:$0xf]
      %v582 = vld [vmem:[%s5 + $0xc] sm:$0xf]
      %v583 = vpack.c.bf16 %v576, %v575
      %v584 = vpack.c.bf16 %v578, %v577
      %v585 = vld [vmem:[%s6] sm:$0xff]
      %v586 = vld [vmem:[%s6 + $0x8] sm:$0xff]
      %v587 = vld [vmem:[%s6 + $0x10] sm:$0xff]
      %v588 = vld [vmem:[%s6 + $0x18] sm:$0xff]
      %590 = vset.pattern.permute.xlu0 0
      %591 = vperm.xlu0 %590, %v585
      %v592 = vpop.permute.xlu0 %591
      %595 = vset.pattern.permute.xlu0 0
      %596 = vperm.xlu0 %595, %v586
      %v597 = vpop.permute.xlu0 %596
      %600 = vset.pattern.permute.xlu0 0
      %601 = vperm.xlu0 %600, %v587
      %v602 = vpop.permute.xlu0 %601
      %605 = vset.pattern.permute.xlu0 0
      %606 = vperm.xlu0 %605, %v588
      %v607 = vpop.permute.xlu0 %606
      %v613 = vunpack.c.l.b16 %v579
      %v614 = vunpack.c.l.b16 %v580
      %v615 = vunpack.c.l.b16 %v581
      %v616 = vunpack.c.l.b16 %v582
      %v617 = vpack.c.b16 %v614, %v613
      %v618 = vpack.c.b16 %v616, %v615
      %v620 = vsel %vm426, %v617, 0
      %v623 = vsel %vm426, %v618, 0
      %625 = vmatprep.subr.bf16.mxu0 0
      %626 = vmatpush1.bf16.msra.mxu0 0
      %627 = vmatprep.subr.bf16.mxu0 0
      %628 = vmatpush1.bf16.msra.mxu0 0
      %629 = vmatprep.subr.bf16.mxu0 0
      %630 = vmatpush1.bf16.msra.mxu0 0
      %631 = vmatprep.subr.bf16.mxu0 0
      %632 = vmatpush1.bf16.msra.mxu0 0
      %633 = vmatprep.subr.bf16.mxu0 0
      %634 = vmatpush1.bf16.msra.mxu0 0
      %635 = vmatprep.subr.bf16.mxu0 0
      %636 = vmatpush1.bf16.msra.mxu0 0
      %637 = vmatprep.subr.bf16.mxu0 0
      %638 = vmatpush1.bf16.msra.mxu0 %v584
      %639 = vmatprep.subr.bf16.mxu0 0
      %640 = vmatpush1.bf16.msra.mxu0 %v583
      %641 = vmatprep.subr.bf16.mxu0 0
      %642 = vmatpush2.bf16.msra.mxu0 0
      %643 = vmatprep.subr.bf16.mxu0 0
      %644 = vmatpush2.bf16.msra.mxu0 0
      %645 = vmatprep.subr.bf16.mxu0 0
      %646 = vmatpush2.bf16.msra.mxu0 0
      %647 = vmatprep.subr.bf16.mxu0 0
      %648 = vmatpush2.bf16.msra.mxu0 0
      %649 = vmatprep.subr.bf16.mxu0 0
      %650 = vmatpush2.bf16.msra.mxu0 0
      %651 = vmatprep.subr.bf16.mxu0 0
      %652 = vmatpush2.bf16.msra.mxu0 0
      %653 = vmatprep.subr.bf16.mxu0 0
      %654 = vmatpush2.bf16.msra.mxu0 0
      %655 = vmatprep.subr.bf16.mxu0 0
      %656 = vmatpush2.bf16.msra.mxu0 0
      %657 = vmatprep.mubr.bf16.mxu0 0
      %658 = vmatmul.mubr.bf16.gmra.mxu0 %v620
      %v659 = vpop.f32.mrf.mxu0
      %v660 = vadd.f32 %v592, %v659
      %v661 = vpop.f32.mrf.mxu0
      %v662 = vpop.f32.mrf.mxu0
      %v663 = vadd.f32 %v597, %v662
      %v664 = vpop.f32.mrf.mxu0
      %665 = vmatprep.mubr.bf16.mxu0 0
      %666 = vmatmul.mubr.bf16.gmra.mxu0 %v623
      %v667 = vpop.f32.mrf.mxu0
      %v668 = vadd.f32 %v602, %v667
      %v669 = vpop.f32.mrf.mxu0
      %v670 = vpop.f32.mrf.mxu0
      %v671 = vadd.f32 %v607, %v670
      %v672 = vpop.f32.mrf.mxu0
      %673 = vdwg.mxu0
      %v674 = vmax.f32 %v660, 0.0
      %v675 = vmax.f32 %v663, 0.0
      %v676 = vmax.f32 %v668, 0.0
      %v677 = vmax.f32 %v671, 0.0
      %v678 = vld [vmem:[%s7] sm:$0xf]
      %v679 = vld [vmem:[%s7 + $0x4] sm:$0xf]
      %v680 = vld [vmem:[%s7 + $0x8] sm:$0xf]
      %v681 = vld [vmem:[%s7 + $0xc] sm:$0xf]
      %v682 = vpack.c.bf16 %v675, %v674
      %v683 = vpack.c.bf16 %v677, %v676
      %v684 = vld [vmem:[%s8] sm:$0xff]
      %v685 = vld [vmem:[%s8 + $0x8] sm:$0xff]
      %v686 = vld [vmem:[%s8 + $0x10] sm:$0xff]
      %v687 = vld [vmem:[%s8 + $0x18] sm:$0xff]
      %689 = vset.pattern.permute.xlu0 0
      %690 = vperm.xlu0 %689, %v684
      %v691 = vpop.permute.xlu0 %690
      %694 = vset.pattern.permute.xlu0 0
      %695 = vperm.xlu0 %694, %v685
      %v696 = vpop.permute.xlu0 %695
      %699 = vset.pattern.permute.xlu0 0
      %700 = vperm.xlu0 %699, %v686
      %v701 = vpop.permute.xlu0 %700
      %704 = vset.pattern.permute.xlu0 0
      %705 = vperm.xlu0 %704, %v687
      %v706 = vpop.permute.xlu0 %705
      %v712 = vunpack.c.l.b16 %v678
      %v713 = vunpack.c.l.b16 %v679
      %v714 = vunpack.c.l.b16 %v680
      %v715 = vunpack.c.l.b16 %v681
      %v716 = vpack.c.b16 %v713, %v712
      %v717 = vpack.c.b16 %v715, %v714
      %v719 = vsel %vm426, %v716, 0
      %v722 = vsel %vm426, %v717, 0
      %724 = vmatprep.subr.bf16.mxu0 0
      %725 = vmatpush1.bf16.msra.mxu0 0
      %726 = vmatprep.subr.bf16.mxu0 0
      %727 = vmatpush1.bf16.msra.mxu0 0
      %728 = vmatprep.subr.bf16.mxu0 0
      %729 = vmatpush1.bf16.msra.mxu0 0
      %730 = vmatprep.subr.bf16.mxu0 0
      %731 = vmatpush1.bf16.msra.mxu0 0
      %732 = vmatprep.subr.bf16.mxu0 0
      %733 = vmatpush1.bf16.msra.mxu0 0
      %734 = vmatprep.subr.bf16.mxu0 0
      %735 = vmatpush1.bf16.msra.mxu0 0
      %736 = vmatprep.subr.bf16.mxu0 0
      %737 = vmatpush1.bf16.msra.mxu0 %v683
      %738 = vmatprep.subr.bf16.mxu0 0
      %739 = vmatpush1.bf16.msra.mxu0 %v682
      %740 = vmatprep.subr.bf16.mxu0 0
      %741 = vmatpush2.bf16.msra.mxu0 0
      %742 = vmatprep.subr.bf16.mxu0 0
      %743 = vmatpush2.bf16.msra.mxu0 0
      %744 = vmatprep.subr.bf16.mxu0 0
      %745 = vmatpush2.bf16.msra.mxu0 0
      %746 = vmatprep.subr.bf16.mxu0 0
      %747 = vmatpush2.bf16.msra.mxu0 0
      %748 = vmatprep.subr.bf16.mxu0 0
      %749 = vmatpush2.bf16.msra.mxu0 0
      %750 = vmatprep.subr.bf16.mxu0 0
      %751 = vmatpush2.bf16.msra.mxu0 0
      %752 = vmatprep.subr.bf16.mxu0 0
      %753 = vmatpush2.bf16.msra.mxu0 0
      %754 = vmatprep.subr.bf16.mxu0 0
      %755 = vmatpush2.bf16.msra.mxu0 0
      %756 = vmatprep.mubr.bf16.mxu0 0
      %757 = vmatmul.mubr.bf16.gmra.mxu0 %v719
      %v758 = vpop.f32.mrf.mxu0
      %v759 = vadd.f32 %v691, %v758
      %v760 = vpop.f32.mrf.mxu0
      %v761 = vpop.f32.mrf.mxu0
      %v762 = vadd.f32 %v696, %v761
      %v763 = vpop.f32.mrf.mxu0
      %764 = vmatprep.mubr.bf16.mxu0 0
      %765 = vmatmul.mubr.bf16.gmra.mxu0 %v722
      %v766 = vpop.f32.mrf.mxu0
      %v767 = vadd.f32 %v701, %v766
      %v768 = vpop.f32.mrf.mxu0
      %v769 = vpop.f32.mrf.mxu0
      %v770 = vadd.f32 %v706, %v769
      %v771 = vpop.f32.mrf.mxu0
      %772 = vdwg.mxu0
      %v773 = vxor.u32 %v759, 2147483648
      %v774 = vxor.u32 %v762, 2147483648
      %v775 = vxor.u32 %v767, 2147483648
      %v776 = vxor.u32 %v770, 2147483648
      %v777 = vmul.f32 %v773, 1.442695
      %v778 = vpow.pop %v777
      %v779 = vmul.f32 %v774, 1.442695
      %v780 = vpow.pop %v779
      %v781 = vmul.f32 %v775, 1.442695
      %v782 = vpow.pop %v781
      %v783 = vmul.f32 %v776, 1.442695
      %v784 = vpow.pop %v783
      %v785 = vadd.f32 %v778, 1.0
      %v786 = vadd.f32 %v780, 1.0
      %v787 = vadd.f32 %v782, 1.0
      %v788 = vadd.f32 %v784, 1.0
      %v789 = vrcp.pop %v785
      %v790 = vmul.f32 1.0, %v789
      %v791 = vrcp.pop %v786
      %v792 = vmul.f32 1.0, %v791
      %v793 = vrcp.pop %v787
      %v794 = vmul.f32 1.0, %v793
      %v795 = vrcp.pop %v788
      %v796 = vmul.f32 1.0, %v795
      %vm797 = vcmask 64512
      %798 = vst.msk [vmem:[%s394] sm:$0xff] %vm797, %v790
      %799 = vst.msk [vmem:[%s394 + $0x8] sm:$0xff] %vm797, %v792
      %800 = vst.msk [vmem:[%s394 + $0x10] sm:$0xff] %vm797, %v794
      %801 = vst.msk [vmem:[%s394 + $0x18] sm:$0xff] %vm797, %v796
      %p802 = scmp.lt.s32.totalorder %s24, 1
      %s803 = scalar_select %p802, %s24, 1
      %p804 = scmp.lt.s32.totalorder %s25, 0
      %s805 = scalar_select %p804, %s25, 0
      %s806 = smul.addr %s803, 4
      %s807 = sadd.s32 %s805, %s806
      %s808 = smul.addr %s807, 8
      %s809 = scalar_lea.vmem %s9, %s808
      // Predicated region
      $region57: #{tpu_custom_call.1} parent=55 // pred_check
        %p810 = pneg %p255
      $region58: #{tpu_custom_call.1} parent=55 // pred_check_branch
        %812 = sbr.rel (%p810) target = $region60
      $region59: #{tpu_custom_call.1} parent=55 // pred_region
        _
      $region60: #{tpu_custom_call.1} parent=55 // pred_fallthru
        _
    $region56: #{tpu_custom_call.1} parent=5 // pred_fallthru
      _
    %p813 = scmp.le.s32.totalorder 2, %s15
    // Predicated region
    $region61: #{tpu_custom_call.1} parent=5 // pred_check
      %p814 = pneg %p813
    $region62: #{tpu_custom_call.1} parent=5 // pred_check_branch
      %816 = sbr.rel (%p814) target = $region64
    $region63: #{tpu_custom_call.1} parent=5 // pred_region
      %s817 = ssub.s32 %s15, 2
      // Predicated region
      $region65: #{tpu_custom_call.1} parent=63 // pred_check
        %p818 = pneg %p261
      $region66: #{tpu_custom_call.1} parent=63 // pred_check_branch
        %820 = sbr.rel (%p818) target = $region68
      $region67: #{tpu_custom_call.1} parent=63 // pred_region
        %p821 = scmp.lt.s32.totalorder %s26, 1
        %s822 = scalar_select %p821, %s26, 1
        %p823 = scmp.lt.s32.totalorder %s27, 0
        %s824 = scalar_select %p823, %s27, 0
        %s825 = smul.addr %s822, 4
        %s826 = sadd.s32 %s824, %s825
        %s827 = smul.addr %s826, 8
        %s828 = scalar_lea.vmem %s9, %s827
      $region68: #{tpu_custom_call.1} parent=63 // pred_fallthru
        _
    $region64: #{tpu_custom_call.1} parent=5 // pred_fallthru
      _
  $region6: #{tpu_custom_call.1} parent=0 // loop_footer
    %s19 = sadd.s32 1, %s15
  $region7: #{tpu_custom_call.1} parent=0 // loop_footer_branch
    %14 = sbr.rel target = $region3
  $region8: #{tpu_custom_call.1} parent=0 // loop_exit
    _

</llo_original>
